<compile_context>
chip_gen: v6e
topology: v6e:2x2x1
jax: 0.10.0
libtpu: 0.0.40
codegen_flags: <defaults>
</compile_context>

<pallas_src>
import functools
import math

import jax
import jax.numpy as jnp
from jax.experimental import pallas as pl
from jax.experimental.pallas import tpu as pltpu

_KMAX = 17                    # largest kernel -> fused effective kernel size
_HALO = (_KMAX - 1) // 2      # = 8 == one sublane group
_SLOPE = 0.1                  # LeakyReLU slope; MUST map 0 -> 0 (see note above)


# ---------------------------------------------------------------------------
# Kernel: one (batch, time-tile) step
# ---------------------------------------------------------------------------
def _resblock_kernel(curr_ref, left_ref, right_ref, w_ref, b_ref, o_ref, *,
                     tile_t, cpad, use_im2col, compute_dtype):
    j = pl.program_id(1)
    nt = pl.num_programs(1)

    xc = curr_ref[0]                                       # (TILE_T, Cp) raw x (f32)
    # Halo rows from the neighbouring tiles; zero them at the sequence ends.
    # (Multiplicative mask == the conv's 'same' zero padding; relies on act(0)=0.)
    left = left_ref[0] * (j > 0).astype(jnp.float32)       # (8, Cp)
    right = right_ref[0] * (j < nt - 1).astype(jnp.float32)

    a = jnp.concatenate([left, xc, right], axis=0)         # (TILE_T + 16, Cp) f32
    # LeakyReLU in f32, then cast ONCE to the MXU compute dtype.
    a = jnp.where(a >= 0, a, a * _SLOPE).astype(compute_dtype)

    if use_im2col:
        # im2col over the 17 taps (sublane shifts) -> ONE MXU matmul, K = 17*Cp.
        cols = [a[k:k + tile_t, :] for k in range(_KMAX)]
        im2col = jnp.concatenate(cols, axis=1)             # (TILE_T, 17*Cp)
        conv = jnp.dot(im2col, w_ref[...],                 # w: (17*Cp, Cp), compute dtype
                       preferred_element_type=jnp.float32)
    else:
        # Per-tap accumulation: no materialized im2col buffer (VMEM relief for
        # large C; K=Cp>=256 already fills the v6e/v7x MXU).
        conv = jnp.zeros((tile_t, cpad), jnp.float32)
        for k in range(_KMAX):                             # unrolled, 17 taps
            conv += jnp.dot(a[k:k + tile_t, :], w_ref[k],  # w: (17, Cp, Cp)
                            preferred_element_type=jnp.float32)

    # bias and 1/sqrt(3) are pre-folded into w/b; fuse the residual add (f32).
    o_ref[0] = xc + conv + b_ref[...]


# ---------------------------------------------------------------------------
# Parameter fusion (done once, on tiny weight tensors)
# ---------------------------------------------------------------------------
def _round_up(n, m):
    return ((n + m - 1) // m) * m


def _padded_channels(c):
    """Lane-dense channel width: multiple of 128 for real model sizes,
    multiple of 8 for tiny C (don't blow up HBM traffic 16-32x just for lanes)."""
    if c % 128 == 0:
        return c
    if c >= 64:
        return _round_up(c, 128)
    return _round_up(c, 8)


def _fuse_conv_params(params, channels, cpad):
    """Fold the three grouped 'same' convs + 1/sqrt(3) into one dense k=17 conv.

    Returns:
      dense: (17, Cp, Cp) f32, index [tap, c_in, c_out]; padded channels are zero.
      b_row: (1, Cp) f32.
    """
    groups = params["groups"]
    cpg = channels // groups                 # in == out channels per group
    dense = jnp.zeros((_KMAX, cpad, cpad), jnp.float32)
    for w in (params["w11"], params["w13"], params["w17"]):
        kk = w.shape[-1]
        off = (_KMAX - kk) // 2              # center-pad smaller kernels
        for g in range(groups):
            blk = w[g * cpg:(g + 1) * cpg]          # (out_pg, in_pg, kk)
            blk = jnp.transpose(blk, (2, 1, 0))     # (kk, in_pg, out_pg)
            dense = dense.at[off:off + kk,
                             g * cpg:(g + 1) * cpg,
                             g * cpg:(g + 1) * cpg].add(blk)
    scale = 1.0 / math.sqrt(3.0)
    dense = dense * scale
    b = (params["b11"] + params["b13"] + params["b17"]) * scale
    b_row = jnp.zeros((1, cpad), jnp.float32).at[0, :channels].set(b)
    return dense, b_row


def _choose_tile(t_full, cpad, itemsize, use_im2col, budget_bytes, tile_max):
    """Largest power-of-two-ish time tile whose per-step VMEM footprint fits."""
    fixed = _KMAX * cpad * cpad * itemsize          # fused weight (single copy)
    fixed += cpad * 4                               # bias
    fixed += 2 * 2 * _HALO * cpad * 4               # halo blocks (double-buffered)
    tile_max = max(min(tile_max, t_full), 8)
    best = 8
    for t in (1024, 512, 256, 128, 64, 32, 16, 8):
        if t > tile_max:
            continue
        per = 2 * 2 * t * cpad * 4                          # curr-in + out blocks, x2 buf
        per += (t + 2 * _HALO) * cpad * 4                   # f32 concat of the tile
        per += (t + 2 * _HALO) * cpad * itemsize            # activated `a` (compute dtype)
        per += t * cpad * 4                                 # f32 conv accumulator
        if use_im2col:
            per += t * _KMAX * cpad * itemsize              # materialized im2col
        else:
            per += 2 * t * cpad * itemsize                  # shifted-slice temps
        if fixed + per <= budget_bytes:
            return t
    return best


# ---------------------------------------------------------------------------
# Wrappers
# ---------------------------------------------------------------------------
def speech_res_block_time_major(x_tm, params, *, tile_t=None,
                                compute_dtype=jnp.bfloat16,
                                use_im2col=None,
                                vmem_budget_bytes=48 * 1024 * 1024):
    """x_tm: (B, T, C) f32 -> (B, T, C) f32.  Preferred (transpose-free) API."""
    B, T, C = x_tm.shape
    Cp = _padded_channels(C)
    dense, b_row = _fuse_conv_params(params, C, Cp)
    if use_im2col is None:
        # Small padded C: single K=17*Cp matmul.  Large C: per-tap accumulation.
        # TODO(synk): on v5e prefer use_im2col=False even for small C (single vst slot).
        use_im2col = Cp < 256
    itemsize = jnp.dtype(compute_dtype).itemsize

    # Weight layout + dtype fixed once, wrapper-side (no in-kernel casts).
    if use_im2col:
        w_k = dense.reshape(_KMAX * Cp, Cp).astype(compute_dtype)   # row = tap*Cp + c_in
    else:
        w_k = dense.astype(compute_dtype)                           # (17, Cp, Cp)

    # Time tile: multiple of 8 (sublane granularity), derived from the per-core
    # VMEM budget (48 MiB default fits v7x's 64 MiB/TC; plenty on v5e/v6e).
    t_full = _round_up(T, 8)
    if tile_t is None:
        tile_t = 1024
    tile = _choose_tile(t_full, Cp, itemsize, use_im2col,
                        int(vmem_budget_bytes * 0.8), tile_t)
    Tp = _round_up(T, tile)
    NT = Tp // tile
    R = tile // _HALO                        # halo block-index stride
    nblk_last = Tp // _HALO - 1

    if Tp != T or Cp != C:
        x_tm = jnp.pad(x_tm, ((0, 0), (0, Tp - T), (0, Cp - C)))

    kernel = functools.partial(_resblock_kernel, tile_t=tile, cpad=Cp,
                               use_im2col=use_im2col, compute_dtype=compute_dtype)

    y_tm = pl.pallas_call(
        kernel,
        out_shape=jax.ShapeDtypeStruct((B, Tp, Cp), jnp.float32),
        grid=(B, NT),
        in_specs=[
            # current tile (also the residual input)
            pl.BlockSpec((1, tile, Cp), lambda b, j: (b, j, 0)),
            # 8-row left / right halos of the SAME array (clamped at sequence
            # ends; zeroed in-kernel there) -> only TILE+16 rows DMA'd per step.
            pl.BlockSpec((1, _HALO, Cp),
                         lambda b, j: (b, jnp.maximum(j * R - 1, 0), 0)),
            pl.BlockSpec((1, _HALO, Cp),
                         lambda b, j: (b, jnp.minimum((j + 1) * R, nblk_last), 0)),
            # grid-invariant fused weight / bias: whole-array VMEM residents,
            # single copy (no pipeline double-buffering).
            pl.BlockSpec(memory_space=pltpu.MemorySpace.VMEM),
            pl.BlockSpec(memory_space=pltpu.MemorySpace.VMEM),
        ],
        out_specs=pl.BlockSpec((1, tile, Cp), lambda b, j: (b, j, 0)),
        compiler_params=pltpu.CompilerParams(
            dimension_semantics=("parallel", "parallel"),
            vmem_limit_bytes=int(vmem_budget_bytes)),
    )(x_tm, x_tm, x_tm, w_k, b_row)

    return y_tm[:, :T, :C]


def speech_res_block(x, params, **kwargs):
    """x: (B, C, T) f32 -> (B, C, T) f32 (PyTorch-compatible layout).

    Prefer speech_res_block_time_major in a full model to avoid these
    wrapper-side transposes (two extra HBM round-trips in the mem-bound regime).
    """
    x_tm = jnp.transpose(x, (0, 2, 1))                       # (B, T, C)
    y_tm = speech_res_block_time_major(x_tm, params, **kwargs)
    return jnp.transpose(y_tm, (0, 2, 1))                    # back to (B, C, T)


# ---------------------------------------------------------------------------
# Deterministic init (torch Conv1d defaults; weight_norm is identity at init)
# ---------------------------------------------------------------------------
def init_params(key, channels, groups):
    cpg = channels // groups
    ks = jax.random.split(key, 6)

    def conv_init(kw, kb, ksize):
        bound = 1.0 / math.sqrt(cpg * ksize)
        w = jax.random.uniform(kw, (channels, cpg, ksize), jnp.float32,
                               -bound, bound)
        b = jax.random.uniform(kb, (channels,), jnp.float32, -bound, bound)
        return w, b

    w11, b11 = conv_init(ks[0], ks[1], 11)
    w13, b13 = conv_init(ks[2], ks[3], 13)
    w17, b17 = conv_init(ks[4], ks[5], 17)
    return dict(w11=w11, b11=b11, w13=w13, b13=b13, w17=w17, b17=b17,
                groups=groups)


def _reference(x, params):
    """Pure-JAX reference of SpeechResBlockRef.forward (self-check)."""
    a = jnp.where(x >= 0, x, x * _SLOPE)

    def conv(w, b):
        y = jax.lax.conv_general_dilated(
            a, w, window_strides=(1,), padding="SAME",
            dimension_numbers=("NCH", "OIH", "NCH"),
            feature_group_count=params["groups"],
            precision=jax.lax.Precision.HIGHEST)
        return y + b[None, :, None]

    tot = (conv(params["w11"], params["b11"])
           + conv(params["w13"], params["b13"])
           + conv(params["w17"], params["b17"]))
    return x + tot / jnp.sqrt(jnp.float32(3.0))


if __name__ == "__main__":
    key = jax.random.PRNGKey(0)
    B, C, T, groups = 2, 4, 50, 2
    kx, kp = jax.random.split(key)
    x = jax.random.normal(kx, (B, C, T), jnp.float32)
    params = init_params(kp, C, groups)
    ref = _reference(x, params)

    # Small tile so the demo exercises time tiling + halo handling (T=50 -> 4 tiles).
    # 1) f32, im2col path (small-C default strategy) -- tight check.
    out = speech_res_block(x, params, tile_t=16, compute_dtype=jnp.float32)
    jax.block_until_ready(out)
    assert out.shape == (B, C, T) and out.dtype == jnp.float32
    err = float(jnp.max(jnp.abs(out - ref)))
    assert err < 2e-2, f"f32 im2col path: max |err| vs reference = {err}"

    # 2) f32, per-tap accumulation path (large-C / v5e strategy) -- tight check.
    out_pt = speech_res_block(x, params, tile_t=16, compute_dtype=jnp.float32,
                              use_im2col=False)
    jax.block_until_ready(out_pt)
    err_pt = float(jnp.max(jnp.abs(out_pt - ref)))
    assert err_pt < 2e-2, f"f32 per-tap path: max |err| vs reference = {err_pt}"

    # 3) bf16 compute (default) -- loose tolerance (bf16 MXU inputs, f32 accum).
    out_bf = speech_res_block(x, params, tile_t=16)
    jax.block_until_ready(out_bf)
    err_bf = float(jnp.max(jnp.abs(out_bf - ref)))
    assert err_bf < 3e-1, f"bf16 path: max |err| vs reference = {err_bf}"

    print("KERNEL_OK")
</pallas_src>

<mosaic_0001>
module attributes {stable_mosaic.version = 11 : i64} {
  func.func @_resblock_kernel(%arg0: i32, %arg1: i32, %arg2: memref<1x16x8xf32, #tpu.memory_space<vmem>>, %arg3: memref<1x8x8xf32, #tpu.memory_space<vmem>>, %arg4: memref<1x8x8xf32, #tpu.memory_space<vmem>>, %arg5: memref<136x8xf32, #tpu.memory_space<vmem>>, %arg6: memref<1x8xf32, #tpu.memory_space<vmem>>, %arg7: memref<1x16x8xf32, #tpu.memory_space<vmem>>) attributes {dimension_semantics = [#tpu.dimension_semantics<parallel>, #tpu.dimension_semantics<parallel>], iteration_bounds = array<i64: 2, 4>, scalar_prefetch = 0 : i64, scratch_operands = 0 : i64, tpu.core_type = #tpu.core_type<tc>, window_params = [{transform_indices = @transform_0, window_bounds = array<i64: 1, 16, 8>}, {transform_indices = @transform_1, window_bounds = array<i64: 1, 8, 8>}, {transform_indices = @transform_2, window_bounds = array<i64: 1, 8, 8>}, {pipeline_mode = #tpu.pipeline_mode<synchronous>, transform_indices = @transform_3, window_bounds = array<i64: 136, 8>}, {pipeline_mode = #tpu.pipeline_mode<synchronous>, transform_indices = @transform_4, window_bounds = array<i64: 1, 8>}, {transform_indices = @transform_5, window_bounds = array<i64: 1, 16, 8>}]} {
    %c0 = arith.constant 0 : index
    %c0_0 = arith.constant 0 : index
    %c0_1 = arith.constant 0 : index
    %0 = vector.load %arg2[%c0, %c0_0, %c0_1] : memref<1x16x8xf32, #tpu.memory_space<vmem>>, vector<1x16x8xf32>
    %1 = vector.shape_cast %0 : vector<1x16x8xf32> to vector<16x8xf32>
    %c0_2 = arith.constant 0 : index
    %c0_3 = arith.constant 0 : index
    %c0_4 = arith.constant 0 : index
    %2 = vector.load %arg3[%c0_2, %c0_3, %c0_4] : memref<1x8x8xf32, #tpu.memory_space<vmem>>, vector<1x8x8xf32>
    %3 = vector.shape_cast %2 : vector<1x8x8xf32> to vector<8x8xf32>
    %c0_i32 = arith.constant 0 : i32
    %4 = arith.cmpi sgt, %arg1, %c0_i32 : i32
    %5 = arith.extui %4 : i1 to i32
    %6 = arith.sitofp %5 : i32 to f32
    %7 = vector.broadcast %6 : f32 to vector<8x8xf32>
    %8 = arith.mulf %3, %7 : vector<8x8xf32>
    %c0_5 = arith.constant 0 : index
    %c0_6 = arith.constant 0 : index
    %c0_7 = arith.constant 0 : index
    %9 = vector.load %arg4[%c0_5, %c0_6, %c0_7] : memref<1x8x8xf32, #tpu.memory_space<vmem>>, vector<1x8x8xf32>
    %10 = vector.shape_cast %9 : vector<1x8x8xf32> to vector<8x8xf32>
    %c3_i32 = arith.constant 3 : i32
    %11 = arith.cmpi slt, %arg1, %c3_i32 : i32
    %12 = arith.extui %11 : i1 to i32
    %13 = arith.sitofp %12 : i32 to f32
    %14 = vector.broadcast %13 : f32 to vector<8x8xf32>
    %15 = arith.mulf %10, %14 : vector<8x8xf32>
    %16 = tpu.concatenate %8, %1, %15 in 0 : vector<8x8xf32>, vector<16x8xf32>, vector<8x8xf32> -> vector<32x8xf32>
    %cst = arith.constant 0.000000e+00 : f32
    %17 = vector.broadcast %cst : f32 to vector<32x8xf32>
    %18 = arith.cmpf oge, %16, %17 : vector<32x8xf32>
    %cst_8 = arith.constant 1.000000e-01 : f32
    %19 = vector.broadcast %cst_8 : f32 to vector<32x8xf32>
    %20 = arith.mulf %16, %19 : vector<32x8xf32>
    %21 = arith.select %18, %16, %20 : vector<32x8xi1>, vector<32x8xf32>
    %22 = vector.extract_strided_slice %21 {offsets = [0, 0], sizes = [16, 8], strides = [1, 1]} : vector<32x8xf32> to vector<16x8xf32>
    %23 = vector.extract_strided_slice %21 {offsets = [1, 0], sizes = [16, 8], strides = [1, 1]} : vector<32x8xf32> to vector<16x8xf32>
    %24 = vector.extract_strided_slice %21 {offsets = [2, 0], sizes = [16, 8], strides = [1, 1]} : vector<32x8xf32> to vector<16x8xf32>
    %25 = vector.extract_strided_slice %21 {offsets = [3, 0], sizes = [16, 8], strides = [1, 1]} : vector<32x8xf32> to vector<16x8xf32>
    %26 = vector.extract_strided_slice %21 {offsets = [4, 0], sizes = [16, 8], strides = [1, 1]} : vector<32x8xf32> to vector<16x8xf32>
    %27 = vector.extract_strided_slice %21 {offsets = [5, 0], sizes = [16, 8], strides = [1, 1]} : vector<32x8xf32> to vector<16x8xf32>
    %28 = vector.extract_strided_slice %21 {offsets = [6, 0], sizes = [16, 8], strides = [1, 1]} : vector<32x8xf32> to vector<16x8xf32>
    %29 = vector.extract_strided_slice %21 {offsets = [7, 0], sizes = [16, 8], strides = [1, 1]} : vector<32x8xf32> to vector<16x8xf32>
    %30 = vector.extract_strided_slice %21 {offsets = [8, 0], sizes = [16, 8], strides = [1, 1]} : vector<32x8xf32> to vector<16x8xf32>
    %31 = vector.extract_strided_slice %21 {offsets = [9, 0], sizes = [16, 8], strides = [1, 1]} : vector<32x8xf32> to vector<16x8xf32>
    %32 = vector.extract_strided_slice %21 {offsets = [10, 0], sizes = [16, 8], strides = [1, 1]} : vector<32x8xf32> to vector<16x8xf32>
    %33 = vector.extract_strided_slice %21 {offsets = [11, 0], sizes = [16, 8], strides = [1, 1]} : vector<32x8xf32> to vector<16x8xf32>
    %34 = vector.extract_strided_slice %21 {offsets = [12, 0], sizes = [16, 8], strides = [1, 1]} : vector<32x8xf32> to vector<16x8xf32>
    %35 = vector.extract_strided_slice %21 {offsets = [13, 0], sizes = [16, 8], strides = [1, 1]} : vector<32x8xf32> to vector<16x8xf32>
    %36 = vector.extract_strided_slice %21 {offsets = [14, 0], sizes = [16, 8], strides = [1, 1]} : vector<32x8xf32> to vector<16x8xf32>
    %37 = vector.extract_strided_slice %21 {offsets = [15, 0], sizes = [16, 8], strides = [1, 1]} : vector<32x8xf32> to vector<16x8xf32>
    %38 = vector.extract_strided_slice %21 {offsets = [16, 0], sizes = [16, 8], strides = [1, 1]} : vector<32x8xf32> to vector<16x8xf32>
    %39 = tpu.concatenate %22, %23, %24, %25, %26, %27, %28, %29, %30, %31, %32, %33, %34, %35, %36, %37 in 1 : vector<16x8xf32>, vector<16x8xf32>, vector<16x8xf32>, vector<16x8xf32>, vector<16x8xf32>, vector<16x8xf32>, vector<16x8xf32>, vector<16x8xf32>, vector<16x8xf32>, vector<16x8xf32>, vector<16x8xf32>, vector<16x8xf32>, vector<16x8xf32>, vector<16x8xf32>, vector<16x8xf32>, vector<16x8xf32> -> vector<16x128xf32>
    %40 = tpu.concatenate %39, %38 in 1 : vector<16x128xf32>, vector<16x8xf32> -> vector<16x136xf32>
    %c0_9 = arith.constant 0 : index
    %c0_10 = arith.constant 0 : index
    %41 = vector.load %arg5[%c0_9, %c0_10] : memref<136x8xf32, #tpu.memory_space<vmem>>, vector<136x8xf32>
    %cst_11 = arith.constant dense<0.000000e+00> : vector<16x8xf32>
    %42 = tpu.matmul %40, %41, %cst_11 {dimension_numbers = #tpu.dot_dimension_numbers<[1], [0], [0], [1], [0, 0, 1, 1], [], []>} : vector<16x136xf32>, vector<136x8xf32>, vector<16x8xf32> -> vector<16x8xf32>
    %43 = arith.addf %1, %42 : vector<16x8xf32>
    %c0_12 = arith.constant 0 : index
    %c0_13 = arith.constant 0 : index
    %44 = vector.load %arg6[%c0_12, %c0_13] : memref<1x8xf32, #tpu.memory_space<vmem>>, vector<1x8xf32>
    %45 = vector.broadcast %44 : vector<1x8xf32> to vector<16x8xf32>
    %46 = arith.addf %43, %45 : vector<16x8xf32>
    %c0_14 = arith.constant 0 : index
    %c0_15 = arith.constant 0 : index
    %c0_16 = arith.constant 0 : index
    %47 = vector.load %arg7[%c0_14, %c0_15, %c0_16] : memref<1x16x8xf32, #tpu.memory_space<vmem>>, vector<1x16x8xf32>
    %48 = vector.shape_cast %47 : vector<1x16x8xf32> to vector<16x8xf32>
    %49 = vector.shape_cast %46 : vector<16x8xf32> to vector<1x16x8xf32>
    tpu.vector_store %arg7[%c0_14, %c0_15, %c0_16], %49 {strides = array<i32>} : memref<1x16x8xf32, #tpu.memory_space<vmem>>, vector<1x16x8xf32>,
    return
  }
  func.func @transform_0(%arg0: i32, %arg1: i32) -> (i32, i32, i32) {
    %c0_i32 = arith.constant 0 : i32
    %c0_i32_0 = arith.constant 0 : i32
    return %arg0, %arg1, %c0_i32 : i32, i32, i32
  }
  func.func @transform_1(%arg0: i32, %arg1: i32) -> (i32, i32, i32) {
    %c2_i32 = arith.constant 2 : i32
    %0 = arith.muli %arg1, %c2_i32 : i32
    %c1_i32 = arith.constant 1 : i32
    %1 = arith.subi %0, %c1_i32 : i32
    %c0_i32 = arith.constant 0 : i32
    %2 = arith.maxsi %1, %c0_i32 : i32
    %c0_i32_0 = arith.constant 0 : i32
    %c0_i32_1 = arith.constant 0 : i32
    return %arg0, %2, %c0_i32_0 : i32, i32, i32
  }
  func.func @transform_2(%arg0: i32, %arg1: i32) -> (i32, i32, i32) {
    %c1_i32 = arith.constant 1 : i32
    %0 = arith.addi %arg1, %c1_i32 : i32
    %c2_i32 = arith.constant 2 : i32
    %1 = arith.muli %0, %c2_i32 : i32
    %c7_i32 = arith.constant 7 : i32
    %2 = arith.minsi %1, %c7_i32 : i32
    %c0_i32 = arith.constant 0 : i32
    %c0_i32_0 = arith.constant 0 : i32
    return %arg0, %2, %c0_i32 : i32, i32, i32
  }
  func.func @transform_3(%arg0: i32, %arg1: i32) -> (i32, i32) {
    %c0_i32 = arith.constant 0 : i32
    %c0_i32_0 = arith.constant 0 : i32
    %c0_i32_1 = arith.constant 0 : i32
    return %c0_i32, %c0_i32_0 : i32, i32
  }
  func.func @transform_4(%arg0: i32, %arg1: i32) -> (i32, i32) {
    %c0_i32 = arith.constant 0 : i32
    %c0_i32_0 = arith.constant 0 : i32
    %c0_i32_1 = arith.constant 0 : i32
    return %c0_i32, %c0_i32_0 : i32, i32
  }
  func.func @transform_5(%arg0: i32, %arg1: i32) -> (i32, i32, i32) {
    %c0_i32 = arith.constant 0 : i32
    %c0_i32_0 = arith.constant 0 : i32
    return %arg0, %arg1, %c0_i32 : i32, i32, i32
  }
}

</mosaic_0001>

<llo_original>
// kernel: tpu_custom_call.1
$region0: #{tpu_custom_call.1}
  #allocation0 [shape = 'u32[]', space=smem, size = 0x4, offset = 0x4, fixed_abs, tag = 'smem constant byte address 0x4 - core index']
  #allocation1 [shape = 'u32[144,128]{1,0:T(1,128)}', space=vmem, size = 0x12000, scoped, tag = 'internal scratch']
  %s0 = inlined_call_operand.vmem [shape: f32[2,64,8], index: 0, kind: input, shape index: {}]
  %s1 = inlined_call_operand.vmem [shape: f32[2,64,8], index: 1, kind: input, shape index: {}]
  %s2 = inlined_call_operand.vmem [shape: f32[2,64,8], index: 2, kind: input, shape index: {}]
  %s3 = inlined_call_operand.vmem [shape: f32[136,8], index: 3, kind: input, shape index: {}]
  %s4 = inlined_call_operand.vmem [shape: f32[1,8], index: 4, kind: input, shape index: {}]
  %s5 = inlined_call_operand.vmem [shape: f32[2,64,8], index: 5, kind: output, shape index: {}]
  %s6 = sld [smem:[#allocation0]]
  $region53: #{tpu_custom_call.1} parent=0
    _
  %s8 = ssub.s32 1, %s6
  %s9 = scalar_select 0, %s8, %s6
  loop: start=0, step=1, limit=10
  $region2: #{tpu_custom_call.1} parent=0 // loop_pre_header
    _
  $region3: #{tpu_custom_call.1} parent=0 // loop_header
    %s11 = sphi 0, %s15
    %p12 = scmp.ge.s32.totalorder %s11, 10
    %s18 = sphi 0, %s30
    %s19 = sphi 0, %s26
    %s20 = sphi 0, %s18
    %s21 = sphi 0, %s19
    %s22 = sphi 0, %s20
    %s23 = sphi 0, %s21
    %s35 = sphi 0, %s37
    %s38 = sphi 0, %s35
    %s39 = sphi 0, %s38
    %s55 = sphi 0, %s39
    %s71 = sphi 0, %s73
    %s74 = sphi 0, %s71
    %s75 = sphi 0, %s74
    %s91 = sphi 0, %s75
    %s107 = sphi 0, %s109
    %s110 = sphi 0, %s107
    %s111 = sphi 0, %s110
    %s127 = sphi 0, %s111
    %s131 = sphi 0, %s131
    %s133 = sphi 0, %s131
    %s134 = sphi 0, %s133
    %s148 = sphi 0, %s134
    %s152 = sphi 0, %s152
    %s154 = sphi 0, %s152
    %s155 = sphi 0, %s154
    %s169 = sphi 0, %s155
    %s177 = sphi 0, %s179
    %s180 = sphi 0, %s177
    %s181 = sphi 0, %s180
    %s197 = sphi 0, %s181
  $region4: #{tpu_custom_call.1} parent=0 // loop_header_branch
    %14 = sbr.rel (%p12) target = $region8
  $region5: #{tpu_custom_call.1} parent=0 // loop_body
    %s16 = ssub.s32 %s11, 1
    %s17 = ssub.s32 %s11, 2
    %s24 = sadd.s32 1, %s19
    %p25 = scmp.ge.s32.totalorder %s24, 4
    %s26 = scalar_select %p25, 0, %s24
    %s27 = sadd.s32 1, %s18
    %s28 = scalar_select %p25, %s27, %s18
    %p29 = scmp.ge.s32.totalorder %s28, 2
    %s30 = scalar_select %p29, 0, %s28
    %s31 = ssub.s32 %s18, %s30
    %s32 = ssub.s32 %s19, %s26
    %s33 = sor.u32 %s31, %s32
    %p34 = scmp.eq.s32.totalorder %s33, 0
    %s36 = sadd.s32 %s35, 1
    %s37 = scalar_select %p34, %s35, %s36
    %p40 = pneg %p34
    %p41 = scmp.eq.s32.totalorder %s11, 7
    %p42 = por %p40, %p41
    %p43 = scmp.ne.s32.totalorder %s35, %s38
    %p44 = scmp.eq.s32.totalorder %s11, 0
    %p45 = por %p43, %p44
    %p46 = scmp.ne.s32.totalorder %s35, %s38
    %p47 = scmp.eq.s32.totalorder %s16, 7
    %p48 = por %p46, %p47
    %p49 = scmp.ne.s32.totalorder %s38, %s39
    %p50 = scmp.eq.s32.totalorder %s16, 0
    %p51 = por %p49, %p50
    %p52 = scmp.ne.s32.totalorder %s38, %s39
    %p53 = scmp.eq.s32.totalorder %s17, 7
    %p54 = por %p52, %p53
    %p56 = scmp.ne.s32.totalorder %s39, %s55
    %p57 = scmp.eq.s32.totalorder %s17, 0
    %p58 = por %p56, %p57
    %s59 = smul.u32 %s19, 2
    %s60 = ssub.s32 %s59, 1
    %p61 = scmp.gt.s32.totalorder %s60, 0
    %s62 = scalar_select %p61, %s60, 0
    %s63 = smul.u32 %s26, 2
    %s64 = ssub.s32 %s63, 1
    %p65 = scmp.gt.s32.totalorder %s64, 0
    %s66 = scalar_select %p65, %s64, 0
    %s67 = ssub.s32 %s18, %s30
    %s68 = ssub.s32 %s62, %s66
    %s69 = sor.u32 %s67, %s68
    %p70 = scmp.eq.s32.totalorder %s69, 0
    %s72 = sadd.s32 %s71, 1
    %s73 = scalar_select %p70, %s71, %s72
    %p76 = pneg %p70
    %p77 = scmp.eq.s32.totalorder %s11, 7
    %p78 = por %p76, %p77
    %p79 = scmp.ne.s32.totalorder %s71, %s74
    %p80 = scmp.eq.s32.totalorder %s11, 0
    %p81 = por %p79, %p80
    %p82 = scmp.ne.s32.totalorder %s71, %s74
    %p83 = scmp.eq.s32.totalorder %s16, 7
    %p84 = por %p82, %p83
    %p85 = scmp.ne.s32.totalorder %s74, %s75
    %p86 = scmp.eq.s32.totalorder %s16, 0
    %p87 = por %p85, %p86
    %p88 = scmp.ne.s32.totalorder %s74, %s75
    %p89 = scmp.eq.s32.totalorder %s17, 7
    %p90 = por %p88, %p89
    %p92 = scmp.ne.s32.totalorder %s75, %s91
    %p93 = scmp.eq.s32.totalorder %s17, 0
    %p94 = por %p92, %p93
    %s95 = sadd.s32 %s19, 1
    %s96 = smul.u32 %s95, 2
    %p97 = scmp.lt.s32.totalorder %s96, 7
    %s98 = scalar_select %p97, %s96, 7
    %s99 = sadd.s32 %s26, 1
    %s100 = smul.u32 %s99, 2
    %p101 = scmp.lt.s32.totalorder %s100, 7
    %s102 = scalar_select %p101, %s100, 7
    %s103 = ssub.s32 %s18, %s30
    %s104 = ssub.s32 %s98, %s102
    %s105 = sor.u32 %s103, %s104
    %p106 = scmp.eq.s32.totalorder %s105, 0
    %s108 = sadd.s32 %s107, 1
    %s109 = scalar_select %p106, %s107, %s108
    %p112 = pneg %p106
    %p113 = scmp.eq.s32.totalorder %s11, 7
    %p114 = por %p112, %p113
    %p115 = scmp.ne.s32.totalorder %s107, %s110
    %p116 = scmp.eq.s32.totalorder %s11, 0
    %p117 = por %p115, %p116
    %p118 = scmp.ne.s32.totalorder %s107, %s110
    %p119 = scmp.eq.s32.totalorder %s16, 7
    %p120 = por %p118, %p119
    %p121 = scmp.ne.s32.totalorder %s110, %s111
    %p122 = scmp.eq.s32.totalorder %s16, 0
    %p123 = por %p121, %p122
    %p124 = scmp.ne.s32.totalorder %s110, %s111
    %p125 = scmp.eq.s32.totalorder %s17, 7
    %p126 = por %p124, %p125
    %p128 = scmp.ne.s32.totalorder %s111, %s127
    %p129 = scmp.eq.s32.totalorder %s17, 0
    %p130 = por %p128, %p129
    %s132 = sadd.s32 %s131, 1
    %p135 = scmp.eq.s32.totalorder %s11, 7
    %p136 = scmp.ne.s32.totalorder %s131, %s133
    %p137 = scmp.eq.s32.totalorder %s11, 0
    %p138 = por %p136, %p137
    %p139 = scmp.ne.s32.totalorder %s131, %s133
    %p140 = scmp.eq.s32.totalorder %s16, 7
    %p141 = por %p139, %p140
    %p142 = scmp.ne.s32.totalorder %s133, %s134
    %p143 = scmp.eq.s32.totalorder %s16, 0
    %p144 = por %p142, %p143
    %p145 = scmp.ne.s32.totalorder %s133, %s134
    %p146 = scmp.eq.s32.totalorder %s17, 7
    %p147 = por %p145, %p146
    %p149 = scmp.ne.s32.totalorder %s134, %s148
    %p150 = scmp.eq.s32.totalorder %s17, 0
    %p151 = por %p149, %p150
    %s153 = sadd.s32 %s152, 1
    %p156 = scmp.eq.s32.totalorder %s11, 7
    %p157 = scmp.ne.s32.totalorder %s152, %s154
    %p158 = scmp.eq.s32.totalorder %s11, 0
    %p159 = por %p157, %p158
    %p160 = scmp.ne.s32.totalorder %s152, %s154
    %p161 = scmp.eq.s32.totalorder %s16, 7
    %p162 = por %p160, %p161
    %p163 = scmp.ne.s32.totalorder %s154, %s155
    %p164 = scmp.eq.s32.totalorder %s16, 0
    %p165 = por %p163, %p164
    %p166 = scmp.ne.s32.totalorder %s154, %s155
    %p167 = scmp.eq.s32.totalorder %s17, 7
    %p168 = por %p166, %p167
    %p170 = scmp.ne.s32.totalorder %s155, %s169
    %p171 = scmp.eq.s32.totalorder %s17, 0
    %p172 = por %p170, %p171
    %s173 = ssub.s32 %s18, %s30
    %s174 = ssub.s32 %s19, %s26
    %s175 = sor.u32 %s173, %s174
    %p176 = scmp.eq.s32.totalorder %s175, 0
    %s178 = sadd.s32 %s177, 1
    %s179 = scalar_select %p176, %s177, %s178
    %p182 = pneg %p176
    %p183 = scmp.eq.s32.totalorder %s11, 7
    %p184 = por %p182, %p183
    %p185 = scmp.ne.s32.totalorder %s177, %s180
    %p186 = scmp.eq.s32.totalorder %s11, 0
    %p187 = por %p185, %p186
    %p188 = scmp.ne.s32.totalorder %s177, %s180
    %p189 = scmp.eq.s32.totalorder %s16, 7
    %p190 = por %p188, %p189
    %p191 = scmp.ne.s32.totalorder %s180, %s181
    %p192 = scmp.eq.s32.totalorder %s16, 0
    %p193 = por %p191, %p192
    %p194 = scmp.ne.s32.totalorder %s180, %s181
    %p195 = scmp.eq.s32.totalorder %s17, 7
    %p196 = por %p194, %p195
    %p198 = scmp.ne.s32.totalorder %s181, %s197
    %p199 = scmp.eq.s32.totalorder %s17, 0
    %p200 = por %p198, %p199
    %p201 = scmp.le.s32.totalorder 1, %s11
    %p202 = scmp.lt.s32.totalorder %s11, 9
    %p203 = pnand %p201, %p202
    %p204 = pneg %p203
    // Predicated region
    $region9: #{tpu_custom_call.1} parent=5 // pred_check
      _
    $region10: #{tpu_custom_call.1} parent=5 // pred_check_branch
      %206 = sbr.rel (%p203) target = $region12
    $region11: #{tpu_custom_call.1} parent=5 // pred_region
      %s207 = ssub.s32 %s11, 1
      // Predicated region
      $region13: #{tpu_custom_call.1} parent=11 // pred_check
        %p208 = pneg %p144
      $region14: #{tpu_custom_call.1} parent=11 // pred_check_branch
        %210 = sbr.rel (%p208) target = $region16
      $region15: #{tpu_custom_call.1} parent=11 // pred_region
        _
      $region16: #{tpu_custom_call.1} parent=11 // pred_fallthru
        _
      // Predicated region
      $region17: #{tpu_custom_call.1} parent=11 // pred_check
        %p211 = pneg %p165
      $region18: #{tpu_custom_call.1} parent=11 // pred_check_branch
        %213 = sbr.rel (%p211) target = $region20
      $region19: #{tpu_custom_call.1} parent=11 // pred_region
        _
      $region20: #{tpu_custom_call.1} parent=11 // pred_fallthru
        _
    $region12: #{tpu_custom_call.1} parent=5 // pred_fallthru
      _
    %p214 = scmp.lt.s32.totalorder %s11, 8
    // Predicated region
    $region21: #{tpu_custom_call.1} parent=5 // pred_check
      %p215 = pneg %p214
    $region22: #{tpu_custom_call.1} parent=5 // pred_check_branch
      %217 = sbr.rel (%p215) target = $region24
    $region23: #{tpu_custom_call.1} parent=5 // pred_region
      // Predicated region
      $region25: #{tpu_custom_call.1} parent=23 // pred_check
        %p218 = pneg %p45
      $region26: #{tpu_custom_call.1} parent=23 // pred_check_branch
        %220 = sbr.rel (%p218) target = $region28
      $region27: #{tpu_custom_call.1} parent=23 // pred_region
        %s221 = smul.u32 2, %s19
        %p222 = scmp.lt.s32.totalorder %s18, 1
        %s223 = scalar_select %p222, %s18, 1
        %p224 = scmp.lt.s32.totalorder %s221, 7
        %s225 = scalar_select %p224, %s221, 7
        %s226 = smul.addr %s223, 8
        %s227 = sadd.s32 %s225, %s226
        %s228 = smul.addr %s227, 8
        %s229 = scalar_lea.vmem %s0, %s228
        %s230 = smul.u32 2, %s19
      $region28: #{tpu_custom_call.1} parent=23 // pred_fallthru
        _
      // Predicated region
      $region29: #{tpu_custom_call.1} parent=23 // pred_check
        %p231 = pneg %p81
      $region30: #{tpu_custom_call.1} parent=23 // pred_check_branch
        %233 = sbr.rel (%p231) target = $region32
      $region31: #{tpu_custom_call.1} parent=23 // pred_region
        %s234 = smul.u32 %s19, 2
        %s235 = ssub.s32 %s234, 1
        %p236 = scmp.gt.s32.totalorder %s235, 0
        %s237 = scalar_select %p236, %s235, 0
        %p238 = scmp.lt.s32.totalorder %s18, 1
        %s239 = scalar_select %p238, %s18, 1
        %p240 = scmp.lt.s32.totalorder %s237, 7
        %s241 = scalar_select %p240, %s237, 7
        %s242 = smul.addr %s239, 8
        %s243 = sadd.s32 %s241, %s242
        %s244 = smul.addr %s243, 8
        %s245 = scalar_lea.vmem %s1, %s244
        %s246 = smul.u32 %s19, 2
        %s247 = ssub.s32 %s246, 1
        %p248 = scmp.gt.s32.totalorder %s247, 0
        %s249 = scalar_select %p248, %s247, 0
      $region32: #{tpu_custom_call.1} parent=23 // pred_fallthru
        _
      // Predicated region
      $region33: #{tpu_custom_call.1} parent=23 // pred_check
        %p250 = pneg %p117
      $region34: #{tpu_custom_call.1} parent=23 // pred_check_branch
        %252 = sbr.rel (%p250) target = $region36
      $region35: #{tpu_custom_call.1} parent=23 // pred_region
        %s253 = sadd.s32 %s19, 1
        %s254 = smul.u32 %s253, 2
        %p255 = scmp.lt.s32.totalorder %s254, 7
        %s256 = scalar_select %p255, %s254, 7
        %p257 = scmp.lt.s32.totalorder %s18, 1
        %s258 = scalar_select %p257, %s18, 1
        %p259 = scmp.lt.s32.totalorder %s256, 7
        %s260 = scalar_select %p259, %s256, 7
        %s261 = smul.addr %s258, 8
        %s262 = sadd.s32 %s260, %s261
        %s263 = smul.addr %s262, 8
        %s264 = scalar_lea.vmem %s2, %s263
        %s265 = sadd.s32 %s19, 1
        %s266 = smul.u32 %s265, 2
        %p267 = scmp.lt.s32.totalorder %s266, 7
        %s268 = scalar_select %p267, %s266, 7
      $region36: #{tpu_custom_call.1} parent=23 // pred_fallthru
        _
    $region24: #{tpu_custom_call.1} parent=5 // pred_fallthru
      _
    %p269 = scmp.le.s32.totalorder 1, %s11
    %p270 = scmp.lt.s32.totalorder %s11, 9
    %p271 = pnand %p269, %p270
    %p272 = pneg %p271
    // Predicated region
    $region37: #{tpu_custom_call.1} parent=5 // pred_check
      _
    $region38: #{tpu_custom_call.1} parent=5 // pred_check_branch
      %274 = sbr.rel (%p271) target = $region40
    $region39: #{tpu_custom_call.1} parent=5 // pred_region
      %s275 = ssub.s32 %s11, 1
      %s276 = smul.u32 2, %s21
      %p277 = scmp.lt.s32.totalorder %s20, 1
      %s278 = scalar_select %p277, %s20, 1
      %p279 = scmp.lt.s32.totalorder %s276, 7
      %s280 = scalar_select %p279, %s276, 7
      %s281 = smul.addr %s278, 8
      %s282 = sadd.s32 %s280, %s281
      %s283 = smul.addr %s282, 8
      %s284 = scalar_lea.vmem %s0, %s283
      %p285 = pneg %p51
      %p286 = pneg %p48
      %s287 = smul.u32 %s21, 2
      %s288 = ssub.s32 %s287, 1
      %p289 = scmp.gt.s32.totalorder %s288, 0
      %s290 = scalar_select %p289, %s288, 0
      %p291 = scmp.lt.s32.totalorder %s20, 1
      %s292 = scalar_select %p291, %s20, 1
      %p293 = scmp.lt.s32.totalorder %s290, 7
      %s294 = scalar_select %p293, %s290, 7
      %s295 = smul.addr %s292, 8
      %s296 = sadd.s32 %s294, %s295
      %s297 = smul.addr %s296, 8
      %s298 = scalar_lea.vmem %s1, %s297
      %p299 = pneg %p87
      %p300 = pneg %p84
      %s301 = sadd.s32 %s21, 1
      %s302 = smul.u32 %s301, 2
      %p303 = scmp.lt.s32.totalorder %s302, 7
      %s304 = scalar_select %p303, %s302, 7
      %p305 = scmp.lt.s32.totalorder %s20, 1
      %s306 = scalar_select %p305, %s20, 1
      %p307 = scmp.lt.s32.totalorder %s304, 7
      %s308 = scalar_select %p307, %s304, 7
      %s309 = smul.addr %s306, 8
      %s310 = sadd.s32 %s308, %s309
      %s311 = smul.addr %s310, 8
      %s312 = scalar_lea.vmem %s2, %s311
      %p313 = pneg %p123
      %p314 = pneg %p120
      %p315 = pneg %p144
      %p316 = pneg %p141
      %p317 = pneg %p165
      %p318 = pneg %p162
      %p319 = pneg %p193
      %p320 = pneg %p190
      %s321 = smul.u32 2, %s21
      %p322 = scmp.lt.s32.totalorder %s20, 1
      %s323 = scalar_select %p322, %s20, 1
      %p324 = scmp.lt.s32.totalorder %s321, 7
      %s325 = scalar_select %p324, %s321, 7
      %s326 = smul.addr %s323, 8
      %s327 = sadd.s32 %s325, %s326
      %s328 = smul.addr %s327, 8
      %s329 = scalar_lea.vmem %s5, %s328
      %s330 = smul.u32 2, %s21
      %p331 = scmp.lt.s32.totalorder %s20, 1
      %s332 = scalar_select %p331, %s20, 1
      %p333 = scmp.lt.s32.totalorder %s330, 7
      %s334 = scalar_select %p333, %s330, 7
      %s335 = smul.addr %s332, 8
      %s336 = sadd.s32 %s334, %s335
      %s337 = smul.addr %s336, 8
      %s338 = scalar_lea.vmem %s0, %s337
      %s339 = smul.u32 2, %s21
      %s340 = smul.u32 %s21, 2
      %s341 = ssub.s32 %s340, 1
      %p342 = scmp.gt.s32.totalorder %s341, 0
      %s343 = scalar_select %p342, %s341, 0
      %p344 = scmp.lt.s32.totalorder %s20, 1
      %s345 = scalar_select %p344, %s20, 1
      %p346 = scmp.lt.s32.totalorder %s343, 7
      %s347 = scalar_select %p346, %s343, 7
      %s348 = smul.addr %s345, 8
      %s349 = sadd.s32 %s347, %s348
      %s350 = smul.addr %s349, 8
      %s351 = scalar_lea.vmem %s1, %s350
      %s352 = smul.u32 %s21, 2
      %s353 = ssub.s32 %s352, 1
      %p354 = scmp.gt.s32.totalorder %s353, 0
      %s355 = scalar_select %p354, %s353, 0
      %s356 = sadd.s32 %s21, 1
      %s357 = smul.u32 %s356, 2
      %p358 = scmp.lt.s32.totalorder %s357, 7
      %s359 = scalar_select %p358, %s357, 7
      %p360 = scmp.lt.s32.totalorder %s20, 1
      %s361 = scalar_select %p360, %s20, 1
      %p362 = scmp.lt.s32.totalorder %s359, 7
      %s363 = scalar_select %p362, %s359, 7
      %s364 = smul.addr %s361, 8
      %s365 = sadd.s32 %s363, %s364
      %s366 = smul.addr %s365, 8
      %s367 = scalar_lea.vmem %s2, %s366
      %s368 = sadd.s32 %s21, 1
      %s369 = smul.u32 %s368, 2
      %p370 = scmp.lt.s32.totalorder %s369, 7
      %s371 = scalar_select %p370, %s369, 7
      %s372 = smul.u32 2, %s21
      %p373 = scmp.lt.s32.totalorder %s20, 1
      %s374 = scalar_select %p373, %s20, 1
      %p375 = scmp.lt.s32.totalorder %s372, 7
      %s376 = scalar_select %p375, %s372, 7
      %s377 = smul.addr %s374, 8
      %s378 = sadd.s32 %s376, %s377
      %s379 = smul.addr %s378, 8
      %s380 = scalar_lea.vmem %s5, %s379
      %s381 = smul.u32 2, %s21
      %v382 = vld [vmem:[%s338] sm:$0xff]
      %v383 = vld [vmem:[%s338 + $0x8] sm:$0xff]
      %v384 = vld [vmem:[%s351] sm:$0xff]
      %p385 = scmp.gt.s32.totalorder %s21, 0
      %s386 = scalar_select %p385, 1, 0
      %s387 = scvt.s32.f32 %s386
      %v388 = vstv %s387
      %v389 = vmul.f32 %v384, %v388
      %v390 = vld [vmem:[%s367] sm:$0xff]
      %p391 = scmp.lt.s32.totalorder %s21, 3
      %s392 = scalar_select %p391, 1, 0
      %s393 = scvt.s32.f32 %s392
      %v394 = vstv %s393
      %v395 = vmul.f32 %v390, %v394
      %vm396 = vcmp.ge.f32.partialorder %v389, 0.0
      %vm397 = vcmp.ge.f32.partialorder %v382, 0.0
      %vm398 = vcmp.ge.f32.partialorder %v383, 0.0
      %vm399 = vcmp.ge.f32.partialorder %v395, 0.0
      %v400 = vmul.f32 %v389, 0.1
      %v401 = vmul.f32 %v382, 0.1
      %v402 = vmul.f32 %v383, 0.1
      %v403 = vmul.f32 %v395, 0.1
      %v404 = vsel %vm396, %v389, %v400
      %v405 = vsel %vm397, %v382, %v401
      %v406 = vsel %vm398, %v383, %v402
      %v407 = vsel %vm399, %v395, %v403
      %vm411 = vcmask 1046528
      %v412 = vrot.slane %v404, 1
      %v413 = vrot.slane %v405, 1
      %v414 = vsel %vm411, %v412, %v413
      %v415 = vrot.slane %v406, 1
      %v416 = vsel %vm411, %v413, %v415
      %417 = vrot.lane.b32.xlu0 %v414, 8
      %v418 = vpop.permute.xlu0 %417
      %419 = vrot.lane.b32.xlu0 %v416, 8
      %v420 = vpop.permute.xlu0 %419
      %vm423 = vcmask 1045504
      %v424 = vrot.slane %v404, 2
      %v425 = vrot.slane %v405, 2
      %v426 = vsel %vm423, %v424, %v425
      %v427 = vrot.slane %v406, 2
      %v428 = vsel %vm423, %v425, %v427
      %429 = vrot.lane.b32.xlu0 %v426, 16
      %v430 = vpop.permute.xlu0 %429
      %431 = vrot.lane.b32.xlu0 %v428, 16
      %v432 = vpop.permute.xlu0 %431
      %vm435 = vcmask 1044480
      %v436 = vrot.slane %v404, 3
      %v437 = vrot.slane %v405, 3
      %v438 = vsel %vm435, %v436, %v437
      %v439 = vrot.slane %v406, 3
      %v440 = vsel %vm435, %v437, %v439
      %441 = vrot.lane.b32.xlu0 %v438, 24
      %v442 = vpop.permute.xlu0 %441
      %443 = vrot.lane.b32.xlu0 %v440, 24
      %v444 = vpop.permute.xlu0 %443
      %vm447 = vcmask 1043456
      %v448 = vrot.slane %v404, 4
      %v449 = vrot.slane %v405, 4
      %v450 = vsel %vm447, %v448, %v449
      %v451 = vrot.slane %v406, 4
      %v452 = vsel %vm447, %v449, %v451
      %453 = vrot.lane.b32.xlu0 %v450, 32
      %v454 = vpop.permute.xlu0 %453
      %455 = vrot.lane.b32.xlu0 %v452, 32
      %v456 = vpop.permute.xlu0 %455
      %vm459 = vcmask 1042432
      %v460 = vrot.slane %v404, 5
      %v461 = vrot.slane %v405, 5
      %v462 = vsel %vm459, %v460, %v461
      %v463 = vrot.slane %v406, 5
      %v464 = vsel %vm459, %v461, %v463
      %465 = vrot.lane.b32.xlu0 %v462, 40
      %v466 = vpop.permute.xlu0 %465
      %467 = vrot.lane.b32.xlu0 %v464, 40
      %v468 = vpop.permute.xlu0 %467
      %vm471 = vcmask 1041408
      %v472 = vrot.slane %v404, 6
      %v473 = vrot.slane %v405, 6
      %v474 = vsel %vm471, %v472, %v473
      %v475 = vrot.slane %v406, 6
      %v476 = vsel %vm471, %v473, %v475
      %477 = vrot.lane.b32.xlu0 %v474, 48
      %v478 = vpop.permute.xlu0 %477
      %479 = vrot.lane.b32.xlu0 %v476, 48
      %v480 = vpop.permute.xlu0 %479
      %vm483 = vcmask 1040384
      %v484 = vrot.slane %v404, 7
      %v485 = vrot.slane %v405, 7
      %v486 = vsel %vm483, %v484, %v485
      %v487 = vrot.slane %v406, 7
      %v488 = vsel %vm483, %v485, %v487
      %489 = vrot.lane.b32.xlu0 %v486, 56
      %v490 = vpop.permute.xlu0 %489
      %491 = vrot.lane.b32.xlu0 %v488, 56
      %v492 = vpop.permute.xlu0 %491
      %495 = vrot.lane.b32.xlu0 %v405, 64
      %v496 = vpop.permute.xlu0 %495
      %497 = vrot.lane.b32.xlu0 %v406, 64
      %v498 = vpop.permute.xlu0 %497
      %v502 = vrot.slane %v407, 1
      %v503 = vsel %vm411, %v415, %v502
      %504 = vrot.lane.b32.xlu0 %v416, 72
      %v505 = vpop.permute.xlu0 %504
      %506 = vrot.lane.b32.xlu0 %v503, 72
      %v507 = vpop.permute.xlu0 %506
      %v510 = vrot.slane %v407, 2
      %v511 = vsel %vm423, %v427, %v510
      %512 = vrot.lane.b32.xlu0 %v428, 80
      %v513 = vpop.permute.xlu0 %512
      %514 = vrot.lane.b32.xlu0 %v511, 80
      %v515 = vpop.permute.xlu0 %514
      %v518 = vrot.slane %v407, 3
      %v519 = vsel %vm435, %v439, %v518
      %520 = vrot.lane.b32.xlu0 %v440, 88
      %v521 = vpop.permute.xlu0 %520
      %522 = vrot.lane.b32.xlu0 %v519, 88
      %v523 = vpop.permute.xlu0 %522
      %v526 = vrot.slane %v407, 4
      %v527 = vsel %vm447, %v451, %v526
      %528 = vrot.lane.b32.xlu0 %v452, 96
      %v529 = vpop.permute.xlu0 %528
      %530 = vrot.lane.b32.xlu0 %v527, 96
      %v531 = vpop.permute.xlu0 %530
      %v534 = vrot.slane %v407, 5
      %v535 = vsel %vm459, %v463, %v534
      %536 = vrot.lane.b32.xlu0 %v464, 104
      %v537 = vpop.permute.xlu0 %536
      %538 = vrot.lane.b32.xlu0 %v535, 104
      %v539 = vpop.permute.xlu0 %538
      %v542 = vrot.slane %v407, 6
      %v543 = vsel %vm471, %v475, %v542
      %544 = vrot.lane.b32.xlu0 %v476, 112
      %v545 = vpop.permute.xlu0 %544
      %546 = vrot.lane.b32.xlu0 %v543, 112
      %v547 = vpop.permute.xlu0 %546
      %v550 = vrot.slane %v407, 7
      %v551 = vsel %vm483, %v487, %v550
      %552 = vrot.lane.b32.xlu0 %v488, 120
      %v553 = vpop.permute.xlu0 %552
      %554 = vrot.lane.b32.xlu0 %v551, 120
      %v555 = vpop.permute.xlu0 %554
      %vm558 = vcmask 64512
      %v559 = vsel %vm558, %v404, %v418
      %v560 = vsel %vm558, %v405, %v420
      %vm561 = vcmask 130048
      %v562 = vsel %vm561, %v559, %v430
      %v563 = vsel %vm561, %v560, %v432
      %vm564 = vcmask 195584
      %v565 = vsel %vm564, %v562, %v442
      %v566 = vsel %vm564, %v563, %v444
      %vm567 = vcmask 261120
      %v568 = vsel %vm567, %v565, %v454
      %v569 = vsel %vm567, %v566, %v456
      %vm570 = vcmask 326656
      %v571 = vsel %vm570, %v568, %v466
      %v572 = vsel %vm570, %v569, %v468
      %vm573 = vcmask 392192
      %v574 = vsel %vm573, %v571, %v478
      %v575 = vsel %vm573, %v572, %v480
      %vm576 = vcmask 457728
      %v577 = vsel %vm576, %v574, %v490
      %v578 = vsel %vm576, %v575, %v492
      %vm579 = vcmask 523264
      %v580 = vsel %vm579, %v577, %v496
      %v581 = vsel %vm579, %v578, %v498
      %vm582 = vcmask 588800
      %v583 = vsel %vm582, %v580, %v505
      %v584 = vsel %vm582, %v581, %v507
      %vm585 = vcmask 654336
      %v586 = vsel %vm585, %v583, %v513
      %v587 = vsel %vm585, %v584, %v515
      %vm588 = vcmask 719872
      %v589 = vsel %vm588, %v586, %v521
      %v590 = vsel %vm588, %v587, %v523
      %vm591 = vcmask 785408
      %v592 = vsel %vm591, %v589, %v529
      %v593 = vsel %vm591, %v590, %v531
      %vm594 = vcmask 850944
      %v595 = vsel %vm594, %v592, %v537
      %v596 = vsel %vm594, %v593, %v539
      %vm597 = vcmask 916480
      %v598 = vsel %vm597, %v595, %v545
      %v599 = vsel %vm597, %v596, %v547
      %vm600 = vcmask 982016
      %v601 = vsel %vm600, %v598, %v553
      %v602 = vsel %vm600, %v599, %v555
      %v603 = vld [vmem:[%s3] sm:$0xff]
      %v604 = vld [vmem:[%s3 + $0x8] sm:$0xff]
      %v605 = vld [vmem:[%s3 + $0x10] sm:$0xff]
      %v606 = vld [vmem:[%s3 + $0x18] sm:$0xff]
      %v607 = vld [vmem:[%s3 + $0x20] sm:$0xff]
      %v608 = vld [vmem:[%s3 + $0x28] sm:$0xff]
      %v609 = vld [vmem:[%s3 + $0x30] sm:$0xff]
      %v610 = vld [vmem:[%s3 + $0x38] sm:$0xff]
      %v611 = vld [vmem:[%s3 + $0x40] sm:$0xff]
      %v612 = vld [vmem:[%s3 + $0x48] sm:$0xff]
      %v613 = vld [vmem:[%s3 + $0x50] sm:$0xff]
      %v614 = vld [vmem:[%s3 + $0x58] sm:$0xff]
      %v615 = vld [vmem:[%s3 + $0x60] sm:$0xff]
      %v616 = vld [vmem:[%s3 + $0x68] sm:$0xff]
      %v617 = vld [vmem:[%s3 + $0x70] sm:$0xff]
      %v618 = vld [vmem:[%s3 + $0x78] sm:$0xff]
      %v619 = vld [vmem:[%s3 + $0x80] sm:$0xff]
      %v620 = vsel %vm558, %v406, 0
      %v622 = vsel %vm558, %v407, 0
      %624 = vmatprep.subr.mxu0 0.0
      %625 = vmatpush1.msra.mxu0 %v618
      %626 = vmatprep.subr.mxu0 0.0
      %627 = vmatpush1.msra.mxu0 %v617
      %628 = vmatprep.subr.mxu0 0.0
      %629 = vmatpush1.msra.mxu0 %v616
      %630 = vmatprep.subr.mxu0 0.0
      %631 = vmatpush1.msra.mxu0 %v615
      %632 = vmatprep.subr.mxu0 0.0
      %633 = vmatpush1.msra.mxu0 %v614
      %634 = vmatprep.subr.mxu0 0.0
      %635 = vmatpush1.msra.mxu0 %v613
      %636 = vmatprep.subr.mxu0 0.0
      %637 = vmatpush1.msra.mxu0 %v612
      %638 = vmatprep.subr.mxu0 0.0
      %639 = vmatpush1.msra.mxu0 %v611
      %640 = vmatprep.subr.mxu0 0.0
      %641 = vmatpush1.msra.mxu0 %v610
      %642 = vmatprep.subr.mxu0 0.0
      %643 = vmatpush1.msra.mxu0 %v609
      %644 = vmatprep.subr.mxu0 0.0
      %645 = vmatpush1.msra.mxu0 %v608
      %646 = vmatprep.subr.mxu0 0.0
      %647 = vmatpush1.msra.mxu0 %v607
      %648 = vmatprep.subr.mxu0 0.0
      %649 = vmatpush1.msra.mxu0 %v606
      %650 = vmatprep.subr.mxu0 0.0
      %651 = vmatpush1.msra.mxu0 %v605
      %652 = vmatprep.subr.mxu0 0.0
      %653 = vmatpush1.msra.mxu0 %v604
      %654 = vmatprep.subr.mxu0 0.0
      %655 = vmatpush1.msra.mxu0 %v603
      %656 = vmatprep.subr.mxu0 0.0
      %657 = vmatpush2.msra.mxu0 0.0
      %658 = vmatprep.subr.mxu0 0.0
      %659 = vmatpush2.msra.mxu0 0.0
      %660 = vmatprep.subr.mxu0 0.0
      %661 = vmatpush2.msra.mxu0 0.0
      %662 = vmatprep.subr.mxu0 0.0
      %663 = vmatpush2.msra.mxu0 0.0
      %664 = vmatprep.subr.mxu0 0.0
      %665 = vmatpush2.msra.mxu0 0.0
      %666 = vmatprep.subr.mxu0 0.0
      %667 = vmatpush2.msra.mxu0 0.0
      %668 = vmatprep.subr.mxu0 0.0
      %669 = vmatpush2.msra.mxu0 0.0
      %670 = vmatprep.subr.mxu0 0.0
      %671 = vmatpush2.msra.mxu0 0.0
      %672 = vmatprep.subr.mxu0 0.0
      %673 = vmatpush2.msra.mxu0 0.0
      %674 = vmatprep.subr.mxu0 0.0
      %675 = vmatpush2.msra.mxu0 0.0
      %676 = vmatprep.subr.mxu0 0.0
      %677 = vmatpush2.msra.mxu0 0.0
      %678 = vmatprep.subr.mxu0 0.0
      %679 = vmatpush2.msra.mxu0 0.0
      %680 = vmatprep.subr.mxu0 0.0
      %681 = vmatpush2.msra.mxu0 0.0
      %682 = vmatprep.subr.mxu0 0.0
      %683 = vmatpush2.msra.mxu0 0.0
      %684 = vmatprep.subr.mxu0 0.0
      %685 = vmatpush2.msra.mxu0 0.0
      %686 = vmatprep.subr.mxu0 0.0
      %687 = vmatpush2.msra.mxu0 %v619
      %688 = vmatprep.mubr.f32.mxu0 %v620
      %689 = vmatmul.mubr.f32.gmra.mxu0 %v601
      %v690 = vpop.f32.mrf.mxu0
      %v691 = vadd.f32 0.0, %v690
      %v692 = vpop.f32.mrf.mxu0
      %693 = vmatprep.mubr.f32.mxu0 %v622
      %694 = vmatmul.mubr.f32.gmra.mxu0 %v602
      %v695 = vpop.f32.mrf.mxu0
      %v696 = vadd.f32 0.0, %v695
      %v697 = vpop.f32.mrf.mxu0
      %698 = vdwg.mxu0
      %v699 = vadd.f32 %v382, %v691
      %v700 = vadd.f32 %v383, %v696
      %v701 = vld [vmem:[%s4] sm:$0x1]
      %v703 = vlaneseq
      %v704 = vshrl.u32 %v703, 7
      %v705 = vsub.s32 0, %v704
      %v706 = vrot.slane %v701, %v705
      %v708 = vadd.f32 %v699, %v706
      %v709 = vadd.f32 %v700, %v706
      %710 = vst.msk [vmem:[%s380] sm:$0xff] %vm558, %v708
      %711 = vst.msk [vmem:[%s380 + $0x8] sm:$0xff] %vm558, %v709
      %s712 = smul.u32 2, %s21
      %p713 = scmp.lt.s32.totalorder %s20, 1
      %s714 = scalar_select %p713, %s20, 1
      %p715 = scmp.lt.s32.totalorder %s712, 7
      %s716 = scalar_select %p715, %s712, 7
      %s717 = smul.addr %s714, 8
      %s718 = sadd.s32 %s716, %s717
      %s719 = smul.addr %s718, 8
      %s720 = scalar_lea.vmem %s5, %s719
      // Predicated region
      $region41: #{tpu_custom_call.1} parent=39 // pred_check
        %p721 = pneg %p190
      $region42: #{tpu_custom_call.1} parent=39 // pred_check_branch
        %723 = sbr.rel (%p721) target = $region44
      $region43: #{tpu_custom_call.1} parent=39 // pred_region
        %s724 = smul.u32 2, %s21
      $region44: #{tpu_custom_call.1} parent=39 // pred_fallthru
        _
    $region40: #{tpu_custom_call.1} parent=5 // pred_fallthru
      _
    %p725 = scmp.le.s32.totalorder 2, %s11
    // Predicated region
    $region45: #{tpu_custom_call.1} parent=5 // pred_check
      %p726 = pneg %p725
    $region46: #{tpu_custom_call.1} parent=5 // pred_check_branch
      %728 = sbr.rel (%p726) target = $region48
    $region47: #{tpu_custom_call.1} parent=5 // pred_region
      %s729 = ssub.s32 %s11, 2
      // Predicated region
      $region49: #{tpu_custom_call.1} parent=47 // pred_check
        %p730 = pneg %p196
      $region50: #{tpu_custom_call.1} parent=47 // pred_check_branch
        %732 = sbr.rel (%p730) target = $region52
      $region51: #{tpu_custom_call.1} parent=47 // pred_region
        %s733 = smul.u32 2, %s23
        %p734 = scmp.lt.s32.totalorder %s22, 1
        %s735 = scalar_select %p734, %s22, 1
        %p736 = scmp.lt.s32.totalorder %s733, 7
        %s737 = scalar_select %p736, %s733, 7
        %s738 = smul.addr %s735, 8
        %s739 = sadd.s32 %s737, %s738
        %s740 = smul.addr %s739, 8
        %s741 = scalar_lea.vmem %s5, %s740
      $region52: #{tpu_custom_call.1} parent=47 // pred_fallthru
        _
    $region48: #{tpu_custom_call.1} parent=5 // pred_fallthru
      _
  $region6: #{tpu_custom_call.1} parent=0 // loop_footer
    %s15 = sadd.s32 1, %s11
  $region7: #{tpu_custom_call.1} parent=0 // loop_footer_branch
    %10 = sbr.rel target = $region3
  $region8: #{tpu_custom_call.1} parent=0 // loop_exit
    _

</llo_original>
